<compile_context>
chip_gen: v7x
topology: tpu7x:2x2x1
jax: 0.10.0
libtpu: 0.0.40
codegen_flags: <defaults>
</compile_context>

<pallas_src>
import jax
import jax.numpy as jnp
from jax.experimental import pallas as pl
from jax.experimental.pallas import tpu as pltpu

_LANE = 128
_TILE_CAP = 4096  # lanes (f32) per HW tile; multiple of 128


def _multi_out_kernel(x_ref, y_ref, w_ref, b_ref,
                      x1_ref, x2_ref, x3_ref,
                      y1_ref, y2_ref, y3_ref,
                      d1_ref, d2_ref):
    # x_ref / y_ref : (3, T) VMEM tiles (N squeezed out)
    # w_ref : (3, 3) SMEM, b_ref : (3,) SMEM
    xa = x_ref[0:1, :]
    xb = x_ref[1:2, :]
    xc = x_ref[2:3, :]
    ya = y_ref[0:1, :]
    yb = y_ref[1:2, :]
    yc = y_ref[2:3, :]

    w00 = w_ref[0, 0]; w01 = w_ref[0, 1]; w02 = w_ref[0, 2]
    w10 = w_ref[1, 0]; w11 = w_ref[1, 1]; w12 = w_ref[1, 2]
    w20 = w_ref[2, 0]; w21 = w_ref[2, 1]; w22 = w_ref[2, 2]
    b0 = b_ref[0]; b1 = b_ref[1]; b2 = b_ref[2]

    # VPU scalar-broadcast FMAs (the whole contraction is K=3 -> MXU is waste)
    xo0 = w00 * xa + w01 * xb + w02 * xc + b0
    xo1 = w10 * xa + w11 * xb + w12 * xc + b1
    xo2 = w20 * xa + w21 * xb + w22 * xc + b2
    yo0 = w00 * ya + w01 * yb + w02 * yc + b0
    yo1 = w10 * ya + w11 * yb + w12 * yc + b1
    yo2 = w20 * ya + w21 * yb + w22 * yc + b2

    x1_ref[...] = xo0
    x2_ref[...] = xo1
    x3_ref[...] = xo2
    y1_ref[...] = yo0
    y2_ref[...] = yo1
    y3_ref[...] = yo2
    d1_ref[...] = xo0 - yo2     # x1 - y3
    d2_ref[...] = yo1 - xo2     # y2 - x3


def multiple_outputs_net(x, y, w_conv1, b_conv1):
    """x, y: (N, 3, H, W) float32 (NCHW, matching PyTorch).
    w_conv1: (3, 3, 1, 1), b_conv1: (3,).
    Returns the 8-tuple (x1, x2, x3, y1, y2, y3, x1 - y3, y2 - x3),
    each of shape (N, 1, H, W)."""
    N, C, H, W = x.shape
    assert C == 3 and y.shape == x.shape
    HW = H * W

    # Lane-dense tiling: pad HW to a multiple of 128 (and of the tile width).
    HWp = ((HW + _LANE - 1) // _LANE) * _LANE
    if HWp <= _TILE_CAP:
        T = HWp
    else:
        T = _TILE_CAP
        HWp = ((HWp + T - 1) // T) * T
    num_tiles = HWp // T

    x_flat = x.reshape(N, C, HW)
    y_flat = y.reshape(N, C, HW)
    if HWp != HW:
        pad = ((0, 0), (0, 0), (0, HWp - HW))
        x_flat = jnp.pad(x_flat, pad)
        y_flat = jnp.pad(y_flat, pad)

    w = w_conv1.reshape(3, 3).astype(jnp.float32)   # (Cout, Cin) -> SMEM
    b = b_conv1.reshape(3).astype(jnp.float32)      # (Cout,)     -> SMEM

    squeeze_n = pl.Squeezed()
    in_specs = [
        pl.BlockSpec((squeeze_n, C, T), lambda n, t: (n, 0, t)),   # x tile
        pl.BlockSpec((squeeze_n, C, T), lambda n, t: (n, 0, t)),   # y tile
        pl.BlockSpec(memory_space=pltpu.MemorySpace.SMEM),         # w (3,3)
        pl.BlockSpec(memory_space=pltpu.MemorySpace.SMEM),         # b (3,)
    ]
    chan_spec = pl.BlockSpec((squeeze_n, 1, T), lambda n, t: (n, 0, t))
    out_specs = [chan_spec] * 8
    out_shape = tuple(
        jax.ShapeDtypeStruct((N, 1, HWp), jnp.float32) for _ in range(8))

    # Per-step VMEM: (2 in * 8 sublanes + 8 out * 8 sublanes) * T * 4B,
    # double-buffered -> 640*T bytes (<3 MiB at T=4096). Give generous slack,
    # still far under v7x's 64 MiB per-TC VMEM.
    vmem_limit = max(8 * 1024 * 1024, 4 * 640 * T)

    cost = pl.CostEstimate(
        flops=38 * N * HW,                       # 6 channels * 6 FMA-ish + 2 subs
        transcendentals=0,
        bytes_accessed=(2 * 3 + 8 * 1) * N * HWp * 4,
    )

    outs = pl.pallas_call(
        _multi_out_kernel,
        out_shape=out_shape,
        grid_spec=pltpu.PrefetchScalarGridSpec(
            num_scalar_prefetch=0,
            grid=(N, num_tiles),
            in_specs=in_specs,
            out_specs=out_specs,
        ),
        compiler_params=pltpu.CompilerParams(
            dimension_semantics=("parallel", "parallel"),
            vmem_limit_bytes=vmem_limit),
        cost_estimate=cost,
    )(x_flat, y_flat, w, b)

    def _unflatten(o):
        if HWp != HW:
            o = o[:, :, :HW]
        return o.reshape(N, 1, H, W)

    return tuple(_unflatten(o) for o in outs)


if __name__ == "__main__":
    key = jax.random.PRNGKey(0)
    k_x, k_y, k_w1, k_b1, k_w2, k_b2, k_w3, k_b3 = jax.random.split(key, 8)

    N, C, H, W = 2, 3, 16, 16
    x = jax.random.normal(k_x, (N, C, H, W), dtype=jnp.float32)
    y = jax.random.normal(k_y, (N, C, H, W), dtype=jnp.float32)

    # conv1: Conv2d(3, 3, kernel_size=1) -> weight (3,3,1,1), bias (3,)
    w_conv1 = jax.random.normal(k_w1, (3, 3, 1, 1), dtype=jnp.float32) * 0.1
    b_conv1 = jax.random.normal(k_b1, (3,), dtype=jnp.float32) * 0.1
    # conv2 / conv3 exist in __init__ but are unused in forward; init only.
    w_conv2 = jax.random.normal(k_w2, (3, 1, 1, 1), dtype=jnp.float32) * 0.1
    b_conv2 = jax.random.normal(k_b2, (3,), dtype=jnp.float32) * 0.1
    w_conv3 = jax.random.normal(k_w3, (3, 1, 1, 1), dtype=jnp.float32) * 0.1
    b_conv3 = jax.random.normal(k_b3, (3,), dtype=jnp.float32) * 0.1

    outs = multiple_outputs_net(x, y, w_conv1, b_conv1)
    outs = jax.block_until_ready(outs)

    # Reference check in plain JAX (1x1 conv == channel matmul).
    wm = w_conv1.reshape(3, 3)
    xc_ref = jnp.einsum("oc,nchw->nohw", wm, x) + b_conv1[None, :, None, None]
    yc_ref = jnp.einsum("oc,nchw->nohw", wm, y) + b_conv1[None, :, None, None]
    ref = (xc_ref[:, 0:1], xc_ref[:, 1:2], xc_ref[:, 2:3],
           yc_ref[:, 0:1], yc_ref[:, 1:2], yc_ref[:, 2:3],
           xc_ref[:, 0:1] - yc_ref[:, 2:3],
           yc_ref[:, 1:2] - xc_ref[:, 2:3])
    for got, want in zip(outs, ref):
        assert got.shape == want.shape
        assert jnp.max(jnp.abs(got - want)) < 1e-5

    print("KERNEL_OK")
</pallas_src>

<mosaic_0001>
module attributes {stable_mosaic.version = 11 : i64} {
  func.func @_multi_out_kernel(%arg0: i32, %arg1: i32, %arg2: memref<1x3x256xf32, #tpu.memory_space<vmem>>, %arg3: memref<1x3x256xf32, #tpu.memory_space<vmem>>, %arg4: memref<3x3xf32, #tpu.memory_space<smem>>, %arg5: memref<3xf32, #tpu.memory_space<smem>>, %arg6: memref<1x1x256xf32, #tpu.memory_space<vmem>>, %arg7: memref<1x1x256xf32, #tpu.memory_space<vmem>>, %arg8: memref<1x1x256xf32, #tpu.memory_space<vmem>>, %arg9: memref<1x1x256xf32, #tpu.memory_space<vmem>>, %arg10: memref<1x1x256xf32, #tpu.memory_space<vmem>>, %arg11: memref<1x1x256xf32, #tpu.memory_space<vmem>>, %arg12: memref<1x1x256xf32, #tpu.memory_space<vmem>>, %arg13: memref<1x1x256xf32, #tpu.memory_space<vmem>>) attributes {dimension_semantics = [#tpu.dimension_semantics<parallel>, #tpu.dimension_semantics<parallel>], iteration_bounds = array<i64: 2, 1>, scalar_prefetch = 0 : i64, scratch_operands = 0 : i64, tpu.core_type = #tpu.core_type<tc>, window_params = [{transform_indices = @transform_0, window_bounds = array<i64: 1, 3, 256>}, {transform_indices = @transform_1, window_bounds = array<i64: 1, 3, 256>}, {transform_indices = @transform_2, window_bounds = array<i64: 3, 3>}, {transform_indices = @transform_3, window_bounds = array<i64: 3>}, {transform_indices = @transform_4, window_bounds = array<i64: 1, 1, 256>}, {transform_indices = @transform_5, window_bounds = array<i64: 1, 1, 256>}, {transform_indices = @transform_6, window_bounds = array<i64: 1, 1, 256>}, {transform_indices = @transform_7, window_bounds = array<i64: 1, 1, 256>}, {transform_indices = @transform_8, window_bounds = array<i64: 1, 1, 256>}, {transform_indices = @transform_9, window_bounds = array<i64: 1, 1, 256>}, {transform_indices = @transform_10, window_bounds = array<i64: 1, 1, 256>}, {transform_indices = @transform_11, window_bounds = array<i64: 1, 1, 256>}]} {
    %c0 = arith.constant 0 : index
    %c0_0 = arith.constant 0 : index
    %c0_1 = arith.constant 0 : index
    %0 = vector.load %arg2[%c0, %c0_0, %c0_1] : memref<1x3x256xf32, #tpu.memory_space<vmem>>, vector<1x1x256xf32>
    %1 = vector.shape_cast %0 : vector<1x1x256xf32> to vector<1x256xf32>
    %c0_2 = arith.constant 0 : index
    %c1 = arith.constant 1 : index
    %c0_3 = arith.constant 0 : index
    %2 = vector.load %arg2[%c0_2, %c1, %c0_3] : memref<1x3x256xf32, #tpu.memory_space<vmem>>, vector<1x1x256xf32>
    %3 = vector.shape_cast %2 : vector<1x1x256xf32> to vector<1x256xf32>
    %c0_4 = arith.constant 0 : index
    %c2 = arith.constant 2 : index
    %c0_5 = arith.constant 0 : index
    %4 = vector.load %arg2[%c0_4, %c2, %c0_5] : memref<1x3x256xf32, #tpu.memory_space<vmem>>, vector<1x1x256xf32>
    %5 = vector.shape_cast %4 : vector<1x1x256xf32> to vector<1x256xf32>
    %c0_6 = arith.constant 0 : index
    %c0_7 = arith.constant 0 : index
    %c0_8 = arith.constant 0 : index
    %6 = vector.load %arg3[%c0_6, %c0_7, %c0_8] : memref<1x3x256xf32, #tpu.memory_space<vmem>>, vector<1x1x256xf32>
    %7 = vector.shape_cast %6 : vector<1x1x256xf32> to vector<1x256xf32>
    %c0_9 = arith.constant 0 : index
    %c1_10 = arith.constant 1 : index
    %c0_11 = arith.constant 0 : index
    %8 = vector.load %arg3[%c0_9, %c1_10, %c0_11] : memref<1x3x256xf32, #tpu.memory_space<vmem>>, vector<1x1x256xf32>
    %9 = vector.shape_cast %8 : vector<1x1x256xf32> to vector<1x256xf32>
    %c0_12 = arith.constant 0 : index
    %c2_13 = arith.constant 2 : index
    %c0_14 = arith.constant 0 : index
    %10 = vector.load %arg3[%c0_12, %c2_13, %c0_14] : memref<1x3x256xf32, #tpu.memory_space<vmem>>, vector<1x1x256xf32>
    %11 = vector.shape_cast %10 : vector<1x1x256xf32> to vector<1x256xf32>
    %c0_15 = arith.constant 0 : index
    %c0_16 = arith.constant 0 : index
    %12 = memref.load %arg4[%c0_15, %c0_16] : memref<3x3xf32, #tpu.memory_space<smem>>
    %c0_17 = arith.constant 0 : index
    %c1_18 = arith.constant 1 : index
    %13 = memref.load %arg4[%c0_17, %c1_18] : memref<3x3xf32, #tpu.memory_space<smem>>
    %c0_19 = arith.constant 0 : index
    %c2_20 = arith.constant 2 : index
    %14 = memref.load %arg4[%c0_19, %c2_20] : memref<3x3xf32, #tpu.memory_space<smem>>
    %c1_21 = arith.constant 1 : index
    %c0_22 = arith.constant 0 : index
    %15 = memref.load %arg4[%c1_21, %c0_22] : memref<3x3xf32, #tpu.memory_space<smem>>
    %c1_23 = arith.constant 1 : index
    %c1_24 = arith.constant 1 : index
    %16 = memref.load %arg4[%c1_23, %c1_24] : memref<3x3xf32, #tpu.memory_space<smem>>
    %c1_25 = arith.constant 1 : index
    %c2_26 = arith.constant 2 : index
    %17 = memref.load %arg4[%c1_25, %c2_26] : memref<3x3xf32, #tpu.memory_space<smem>>
    %c2_27 = arith.constant 2 : index
    %c0_28 = arith.constant 0 : index
    %18 = memref.load %arg4[%c2_27, %c0_28] : memref<3x3xf32, #tpu.memory_space<smem>>
    %c2_29 = arith.constant 2 : index
    %c1_30 = arith.constant 1 : index
    %19 = memref.load %arg4[%c2_29, %c1_30] : memref<3x3xf32, #tpu.memory_space<smem>>
    %c2_31 = arith.constant 2 : index
    %c2_32 = arith.constant 2 : index
    %20 = memref.load %arg4[%c2_31, %c2_32] : memref<3x3xf32, #tpu.memory_space<smem>>
    %c0_33 = arith.constant 0 : index
    %21 = memref.load %arg5[%c0_33] : memref<3xf32, #tpu.memory_space<smem>>
    %c1_34 = arith.constant 1 : index
    %22 = memref.load %arg5[%c1_34] : memref<3xf32, #tpu.memory_space<smem>>
    %c2_35 = arith.constant 2 : index
    %23 = memref.load %arg5[%c2_35] : memref<3xf32, #tpu.memory_space<smem>>
    %24 = vector.broadcast %12 : f32 to vector<1x256xf32>
    %25 = arith.mulf %24, %1 : vector<1x256xf32>
    %26 = vector.broadcast %13 : f32 to vector<1x256xf32>
    %27 = arith.mulf %26, %3 : vector<1x256xf32>
    %28 = arith.addf %25, %27 : vector<1x256xf32>
    %29 = vector.broadcast %14 : f32 to vector<1x256xf32>
    %30 = arith.mulf %29, %5 : vector<1x256xf32>
    %31 = arith.addf %28, %30 : vector<1x256xf32>
    %32 = vector.broadcast %21 : f32 to vector<1x256xf32>
    %33 = arith.addf %31, %32 : vector<1x256xf32>
    %34 = vector.broadcast %15 : f32 to vector<1x256xf32>
    %35 = arith.mulf %34, %1 : vector<1x256xf32>
    %36 = vector.broadcast %16 : f32 to vector<1x256xf32>
    %37 = arith.mulf %36, %3 : vector<1x256xf32>
    %38 = arith.addf %35, %37 : vector<1x256xf32>
    %39 = vector.broadcast %17 : f32 to vector<1x256xf32>
    %40 = arith.mulf %39, %5 : vector<1x256xf32>
    %41 = arith.addf %38, %40 : vector<1x256xf32>
    %42 = vector.broadcast %22 : f32 to vector<1x256xf32>
    %43 = arith.addf %41, %42 : vector<1x256xf32>
    %44 = vector.broadcast %18 : f32 to vector<1x256xf32>
    %45 = arith.mulf %44, %1 : vector<1x256xf32>
    %46 = vector.broadcast %19 : f32 to vector<1x256xf32>
    %47 = arith.mulf %46, %3 : vector<1x256xf32>
    %48 = arith.addf %45, %47 : vector<1x256xf32>
    %49 = vector.broadcast %20 : f32 to vector<1x256xf32>
    %50 = arith.mulf %49, %5 : vector<1x256xf32>
    %51 = arith.addf %48, %50 : vector<1x256xf32>
    %52 = vector.broadcast %23 : f32 to vector<1x256xf32>
    %53 = arith.addf %51, %52 : vector<1x256xf32>
    %54 = vector.broadcast %12 : f32 to vector<1x256xf32>
    %55 = arith.mulf %54, %7 : vector<1x256xf32>
    %56 = vector.broadcast %13 : f32 to vector<1x256xf32>
    %57 = arith.mulf %56, %9 : vector<1x256xf32>
    %58 = arith.addf %55, %57 : vector<1x256xf32>
    %59 = vector.broadcast %14 : f32 to vector<1x256xf32>
    %60 = arith.mulf %59, %11 : vector<1x256xf32>
    %61 = arith.addf %58, %60 : vector<1x256xf32>
    %62 = vector.broadcast %21 : f32 to vector<1x256xf32>
    %63 = arith.addf %61, %62 : vector<1x256xf32>
    %64 = vector.broadcast %15 : f32 to vector<1x256xf32>
    %65 = arith.mulf %64, %7 : vector<1x256xf32>
    %66 = vector.broadcast %16 : f32 to vector<1x256xf32>
    %67 = arith.mulf %66, %9 : vector<1x256xf32>
    %68 = arith.addf %65, %67 : vector<1x256xf32>
    %69 = vector.broadcast %17 : f32 to vector<1x256xf32>
    %70 = arith.mulf %69, %11 : vector<1x256xf32>
    %71 = arith.addf %68, %70 : vector<1x256xf32>
    %72 = vector.broadcast %22 : f32 to vector<1x256xf32>
    %73 = arith.addf %71, %72 : vector<1x256xf32>
    %74 = vector.broadcast %18 : f32 to vector<1x256xf32>
    %75 = arith.mulf %74, %7 : vector<1x256xf32>
    %76 = vector.broadcast %19 : f32 to vector<1x256xf32>
    %77 = arith.mulf %76, %9 : vector<1x256xf32>
    %78 = arith.addf %75, %77 : vector<1x256xf32>
    %79 = vector.broadcast %20 : f32 to vector<1x256xf32>
    %80 = arith.mulf %79, %11 : vector<1x256xf32>
    %81 = arith.addf %78, %80 : vector<1x256xf32>
    %82 = vector.broadcast %23 : f32 to vector<1x256xf32>
    %83 = arith.addf %81, %82 : vector<1x256xf32>
    %c0_36 = arith.constant 0 : index
    %c0_37 = arith.constant 0 : index
    %c0_38 = arith.constant 0 : index
    %84 = vector.load %arg6[%c0_36, %c0_37, %c0_38] : memref<1x1x256xf32, #tpu.memory_space<vmem>>, vector<1x1x256xf32>
    %85 = vector.shape_cast %84 : vector<1x1x256xf32> to vector<1x256xf32>
    %86 = vector.shape_cast %33 : vector<1x256xf32> to vector<1x1x256xf32>
    tpu.vector_store %arg6[%c0_36, %c0_37, %c0_38], %86 {strides = array<i32>} : memref<1x1x256xf32, #tpu.memory_space<vmem>>, vector<1x1x256xf32>,
    %c0_39 = arith.constant 0 : index
    %c0_40 = arith.constant 0 : index
    %c0_41 = arith.constant 0 : index
    %87 = vector.load %arg7[%c0_39, %c0_40, %c0_41] : memref<1x1x256xf32, #tpu.memory_space<vmem>>, vector<1x1x256xf32>
    %88 = vector.shape_cast %87 : vector<1x1x256xf32> to vector<1x256xf32>
    %89 = vector.shape_cast %43 : vector<1x256xf32> to vector<1x1x256xf32>
    tpu.vector_store %arg7[%c0_39, %c0_40, %c0_41], %89 {strides = array<i32>} : memref<1x1x256xf32, #tpu.memory_space<vmem>>, vector<1x1x256xf32>,
    %c0_42 = arith.constant 0 : index
    %c0_43 = arith.constant 0 : index
    %c0_44 = arith.constant 0 : index
    %90 = vector.load %arg8[%c0_42, %c0_43, %c0_44] : memref<1x1x256xf32, #tpu.memory_space<vmem>>, vector<1x1x256xf32>
    %91 = vector.shape_cast %90 : vector<1x1x256xf32> to vector<1x256xf32>
    %92 = vector.shape_cast %53 : vector<1x256xf32> to vector<1x1x256xf32>
    tpu.vector_store %arg8[%c0_42, %c0_43, %c0_44], %92 {strides = array<i32>} : memref<1x1x256xf32, #tpu.memory_space<vmem>>, vector<1x1x256xf32>,
    %c0_45 = arith.constant 0 : index
    %c0_46 = arith.constant 0 : index
    %c0_47 = arith.constant 0 : index
    %93 = vector.load %arg9[%c0_45, %c0_46, %c0_47] : memref<1x1x256xf32, #tpu.memory_space<vmem>>, vector<1x1x256xf32>
    %94 = vector.shape_cast %93 : vector<1x1x256xf32> to vector<1x256xf32>
    %95 = vector.shape_cast %63 : vector<1x256xf32> to vector<1x1x256xf32>
    tpu.vector_store %arg9[%c0_45, %c0_46, %c0_47], %95 {strides = array<i32>} : memref<1x1x256xf32, #tpu.memory_space<vmem>>, vector<1x1x256xf32>,
    %c0_48 = arith.constant 0 : index
    %c0_49 = arith.constant 0 : index
    %c0_50 = arith.constant 0 : index
    %96 = vector.load %arg10[%c0_48, %c0_49, %c0_50] : memref<1x1x256xf32, #tpu.memory_space<vmem>>, vector<1x1x256xf32>
    %97 = vector.shape_cast %96 : vector<1x1x256xf32> to vector<1x256xf32>
    %98 = vector.shape_cast %73 : vector<1x256xf32> to vector<1x1x256xf32>
    tpu.vector_store %arg10[%c0_48, %c0_49, %c0_50], %98 {strides = array<i32>} : memref<1x1x256xf32, #tpu.memory_space<vmem>>, vector<1x1x256xf32>,
    %c0_51 = arith.constant 0 : index
    %c0_52 = arith.constant 0 : index
    %c0_53 = arith.constant 0 : index
    %99 = vector.load %arg11[%c0_51, %c0_52, %c0_53] : memref<1x1x256xf32, #tpu.memory_space<vmem>>, vector<1x1x256xf32>
    %100 = vector.shape_cast %99 : vector<1x1x256xf32> to vector<1x256xf32>
    %101 = vector.shape_cast %83 : vector<1x256xf32> to vector<1x1x256xf32>
    tpu.vector_store %arg11[%c0_51, %c0_52, %c0_53], %101 {strides = array<i32>} : memref<1x1x256xf32, #tpu.memory_space<vmem>>, vector<1x1x256xf32>,
    %102 = arith.subf %33, %83 : vector<1x256xf32>
    %c0_54 = arith.constant 0 : index
    %c0_55 = arith.constant 0 : index
    %c0_56 = arith.constant 0 : index
    %103 = vector.load %arg12[%c0_54, %c0_55, %c0_56] : memref<1x1x256xf32, #tpu.memory_space<vmem>>, vector<1x1x256xf32>
    %104 = vector.shape_cast %103 : vector<1x1x256xf32> to vector<1x256xf32>
    %105 = vector.shape_cast %102 : vector<1x256xf32> to vector<1x1x256xf32>
    tpu.vector_store %arg12[%c0_54, %c0_55, %c0_56], %105 {strides = array<i32>} : memref<1x1x256xf32, #tpu.memory_space<vmem>>, vector<1x1x256xf32>,
    %106 = arith.subf %73, %53 : vector<1x256xf32>
    %c0_57 = arith.constant 0 : index
    %c0_58 = arith.constant 0 : index
    %c0_59 = arith.constant 0 : index
    %107 = vector.load %arg13[%c0_57, %c0_58, %c0_59] : memref<1x1x256xf32, #tpu.memory_space<vmem>>, vector<1x1x256xf32>
    %108 = vector.shape_cast %107 : vector<1x1x256xf32> to vector<1x256xf32>
    %109 = vector.shape_cast %106 : vector<1x256xf32> to vector<1x1x256xf32>
    tpu.vector_store %arg13[%c0_57, %c0_58, %c0_59], %109 {strides = array<i32>} : memref<1x1x256xf32, #tpu.memory_space<vmem>>, vector<1x1x256xf32>,
    return
  }
  func.func @transform_0(%arg0: i32, %arg1: i32) -> (i32, i32, i32) {
    %c0_i32 = arith.constant 0 : i32
    %c0_i32_0 = arith.constant 0 : i32
    return %arg0, %c0_i32, %arg1 : i32, i32, i32
  }
  func.func @transform_1(%arg0: i32, %arg1: i32) -> (i32, i32, i32) {
    %c0_i32 = arith.constant 0 : i32
    %c0_i32_0 = arith.constant 0 : i32
    return %arg0, %c0_i32, %arg1 : i32, i32, i32
  }
  func.func @transform_2(%arg0: i32, %arg1: i32) -> (i32, i32) {
    %c0_i32 = arith.constant 0 : i32
    %c0_i32_0 = arith.constant 0 : i32
    %c0_i32_1 = arith.constant 0 : i32
    return %c0_i32, %c0_i32_0 : i32, i32
  }
  func.func @transform_3(%arg0: i32, %arg1: i32) -> i32 {
    %c0_i32 = arith.constant 0 : i32
    %c0_i32_0 = arith.constant 0 : i32
    return %c0_i32 : i32
  }
  func.func @transform_4(%arg0: i32, %arg1: i32) -> (i32, i32, i32) {
    %c0_i32 = arith.constant 0 : i32
    %c0_i32_0 = arith.constant 0 : i32
    return %arg0, %c0_i32, %arg1 : i32, i32, i32
  }
  func.func @transform_5(%arg0: i32, %arg1: i32) -> (i32, i32, i32) {
    %c0_i32 = arith.constant 0 : i32
    %c0_i32_0 = arith.constant 0 : i32
    return %arg0, %c0_i32, %arg1 : i32, i32, i32
  }
  func.func @transform_6(%arg0: i32, %arg1: i32) -> (i32, i32, i32) {
    %c0_i32 = arith.constant 0 : i32
    %c0_i32_0 = arith.constant 0 : i32
    return %arg0, %c0_i32, %arg1 : i32, i32, i32
  }
  func.func @transform_7(%arg0: i32, %arg1: i32) -> (i32, i32, i32) {
    %c0_i32 = arith.constant 0 : i32
    %c0_i32_0 = arith.constant 0 : i32
    return %arg0, %c0_i32, %arg1 : i32, i32, i32
  }
  func.func @transform_8(%arg0: i32, %arg1: i32) -> (i32, i32, i32) {
    %c0_i32 = arith.constant 0 : i32
    %c0_i32_0 = arith.constant 0 : i32
    return %arg0, %c0_i32, %arg1 : i32, i32, i32
  }
  func.func @transform_9(%arg0: i32, %arg1: i32) -> (i32, i32, i32) {
    %c0_i32 = arith.constant 0 : i32
    %c0_i32_0 = arith.constant 0 : i32
    return %arg0, %c0_i32, %arg1 : i32, i32, i32
  }
  func.func @transform_10(%arg0: i32, %arg1: i32) -> (i32, i32, i32) {
    %c0_i32 = arith.constant 0 : i32
    %c0_i32_0 = arith.constant 0 : i32
    return %arg0, %c0_i32, %arg1 : i32, i32, i32
  }
  func.func @transform_11(%arg0: i32, %arg1: i32) -> (i32, i32, i32) {
    %c0_i32 = arith.constant 0 : i32
    %c0_i32_0 = arith.constant 0 : i32
    return %arg0, %c0_i32, %arg1 : i32, i32, i32
  }
}

</mosaic_0001>

<llo_original>
// kernel: tpu_custom_call.1
$region0: #{tpu_custom_call.1}
  #allocation0 [shape = 'u32[]', space=smem, size = 0x4, offset = 0x4, fixed_abs, tag = 'smem constant byte address 0x4 - core index']
  #allocation1 [shape = 'u32[144,128]{1,0:T(1,128)}', space=vmem, size = 0x12000, scoped, tag = 'internal scratch']
  %s0 = inlined_call_operand.vmem [shape: f32[2,3,256], index: 0, kind: input, shape index: {}]
  %s1 = inlined_call_operand.vmem [shape: f32[2,3,256], index: 1, kind: input, shape index: {}]
  %s2 = inlined_call_operand.vmem [shape: f32[3,3], index: 2, kind: input, shape index: {}]
  %s3 = inlined_call_operand.vmem [shape: f32[3], index: 3, kind: input, shape index: {}]
  %s4 = inlined_call_operand.hbm [shape: f32[2,1,256], index: 4, kind: output, shape index: {0}]
  %s5 = inlined_call_operand.hbm [shape: f32[2,1,256], index: 5, kind: output, shape index: {1}]
  %s6 = inlined_call_operand.hbm [shape: f32[2,1,256], index: 6, kind: output, shape index: {2}]
  %s7 = inlined_call_operand.hbm [shape: f32[2,1,256], index: 7, kind: output, shape index: {3}]
  %s8 = inlined_call_operand.hbm [shape: f32[2,1,256], index: 8, kind: output, shape index: {4}]
  %s9 = inlined_call_operand.hbm [shape: f32[2,1,256], index: 9, kind: output, shape index: {5}]
  %s10 = inlined_call_operand.hbm [shape: f32[2,1,256], index: 10, kind: output, shape index: {6}]
  %s11 = inlined_call_operand.hbm [shape: f32[2,1,256], index: 11, kind: output, shape index: {7}]
  %12 = xla_tuple %s4, %s5, %s6, %s7, %s8, %s9, %s10, %s11
  %s13 = sld [smem:[#allocation0]]
  $region113: #{tpu_custom_call.1} parent=0
    _
  %s15 = ssub.s32 1, %s13
  %s16 = scalar_select 0, %s15, %s13
  $region1: #{tpu_custom_call.1} parent=0
    #allocation2 [shape = 'u8[2048]{0}', space=smem, size = 0x800, scoped, tag = 'input window, operand 2, single buffered']
    #allocation3 [shape = 's32[2]{0}', space=sflag, size = 0x8, scoped, tag = 'scoped memory for tpu_custom_call.1']
    #allocation4 [shape = 's32[2]{0}', space=sflag, size = 0x8, scoped, tag = 'scoped memory for tpu_custom_call.1']
    #allocation5 [shape = 'u8[512]{0}', space=smem, size = 0x200, scoped, tag = 'input window, operand 3, single buffered']
    #allocation6 [shape = 's32[1]{0}', space=sflag, size = 0x4, scoped, tag = 'scoped memory for tpu_custom_call.1']
    #allocation7 [shape = 'u8[2048]{0}', space=vmem, size = 0x800, scoped, tag = 'output window, operand 0']
    #allocation8 [shape = 'u8[2048]{0}', space=vmem, size = 0x800, scoped, tag = 'output window, operand 1']
    #allocation9 [shape = 's32[2]{0}', space=sflag, size = 0x8, scoped, tag = 'scoped memory for tpu_custom_call.1']
    #allocation10 [shape = 'u8[2048]{0}', space=vmem, size = 0x800, scoped, tag = 'output window, operand 2']
    #allocation11 [shape = 'u8[2048]{0}', space=vmem, size = 0x800, scoped, tag = 'output window, operand 3']
    #allocation12 [shape = 's32[2]{0}', space=sflag, size = 0x8, scoped, tag = 'scoped memory for tpu_custom_call.1']
    #allocation13 [shape = 'u8[2048]{0}', space=vmem, size = 0x800, scoped, tag = 'output window, operand 4']
    #allocation14 [shape = 'u8[2048]{0}', space=vmem, size = 0x800, scoped, tag = 'output window, operand 5']
    #allocation15 [shape = 's32[2]{0}', space=sflag, size = 0x8, scoped, tag = 'scoped memory for tpu_custom_call.1']
    #allocation16 [shape = 'u8[2048]{0}', space=vmem, size = 0x800, scoped, tag = 'output window, operand 6']
    #allocation17 [shape = 'u8[2048]{0}', space=vmem, size = 0x800, scoped, tag = 'output window, operand 7']
    #allocation18 [shape = 's32[2]{0}', space=sflag, size = 0x8, scoped, tag = 'scoped memory for tpu_custom_call.1']
    %17 = vsyncpa [#allocation4], 0
    %18 = vsyncpa [#allocation6], 0
    %19 = vsyncpa [#allocation3], 0
    %s20 = scalar_lea.sflag [#allocation3], 1
    %21 = vsyncpa %s20, 0
    %22 = vsyncpa [#allocation9], 0
    %s23 = scalar_lea.sflag [#allocation9], 1
    %24 = vsyncpa %s23, 0
    %25 = vsyncpa [#allocation12], 0
    %s26 = scalar_lea.sflag [#allocation12], 1
    %27 = vsyncpa %s26, 0
    %28 = vsyncpa [#allocation15], 0
    %s29 = scalar_lea.sflag [#allocation15], 1
    %30 = vsyncpa %s29, 0
    %31 = vsyncpa [#allocation18], 0
    %s32 = scalar_lea.sflag [#allocation18], 1
    %33 = vsyncpa %s32, 0
    loop: start=0, step=1, limit=4
    $region2: #{tpu_custom_call.1} parent=1 // loop_pre_header
      _
    $region3: #{tpu_custom_call.1} parent=1 // loop_header
      %s35 = sphi 0, %s39
      %p36 = scmp.ge.s32.totalorder %s35, 4
      %s42 = sphi 0, %s54
      %s43 = sphi 0, %s50
      %s44 = sphi 0, %s42
      %s45 = sphi 0, %s43
      %s46 = sphi 0, %s44
      %s47 = sphi 0, %s45
      %s59 = sphi 0, %s61
      %s62 = sphi 0, %s59
      %s63 = sphi 0, %s62
      %s79 = sphi 0, %s63
      %s87 = sphi 0, %s89
      %s90 = sphi 0, %s87
      %s91 = sphi 0, %s90
      %s107 = sphi 0, %s91
      %s111 = sphi 0, %s111
      %s113 = sphi 0, %s111
      %s114 = sphi 0, %s113
      %s128 = sphi 0, %s114
      %s132 = sphi 0, %s132
      %s134 = sphi 0, %s132
      %s135 = sphi 0, %s134
      %s149 = sphi 0, %s135
      %s157 = sphi 0, %s159
      %s160 = sphi 0, %s157
      %s161 = sphi 0, %s160
      %s177 = sphi 0, %s161
      %s185 = sphi 0, %s187
      %s188 = sphi 0, %s185
      %s189 = sphi 0, %s188
      %s205 = sphi 0, %s189
      %s213 = sphi 0, %s215
      %s216 = sphi 0, %s213
      %s217 = sphi 0, %s216
      %s233 = sphi 0, %s217
      %s241 = sphi 0, %s243
      %s244 = sphi 0, %s241
      %s245 = sphi 0, %s244
      %s261 = sphi 0, %s245
      %s269 = sphi 0, %s271
      %s272 = sphi 0, %s269
      %s273 = sphi 0, %s272
      %s289 = sphi 0, %s273
      %s297 = sphi 0, %s299
      %s300 = sphi 0, %s297
      %s301 = sphi 0, %s300
      %s317 = sphi 0, %s301
      %s325 = sphi 0, %s327
      %s328 = sphi 0, %s325
      %s329 = sphi 0, %s328
      %s345 = sphi 0, %s329
      %s353 = sphi 0, %s355
      %s356 = sphi 0, %s353
      %s357 = sphi 0, %s356
      %s373 = sphi 0, %s357
    $region4: #{tpu_custom_call.1} parent=1 // loop_header_branch
      %38 = sbr.rel (%p36) target = $region8
    $region5: #{tpu_custom_call.1} parent=1 // loop_body
      %s40 = ssub.s32 %s35, 1
      %s41 = ssub.s32 %s35, 2
      %s48 = sadd.s32 1, %s43
      %p49 = scmp.ge.s32.totalorder %s48, 1
      %s50 = scalar_select %p49, 0, %s48
      %s51 = sadd.s32 1, %s42
      %s52 = scalar_select %p49, %s51, %s42
      %p53 = scmp.ge.s32.totalorder %s52, 2
      %s54 = scalar_select %p53, 0, %s52
      %s55 = ssub.s32 %s42, %s54
      %s56 = ssub.s32 %s43, %s50
      %s57 = sor.u32 %s55, %s56
      %p58 = scmp.eq.s32.totalorder %s57, 0
      %s60 = sadd.s32 %s59, 1
      %s61 = scalar_select %p58, %s59, %s60
      %p64 = pneg %p58
      %p65 = scmp.eq.s32.totalorder %s35, 1
      %p66 = por %p64, %p65
      %p67 = scmp.ne.s32.totalorder %s59, %s62
      %p68 = scmp.eq.s32.totalorder %s35, 0
      %p69 = por %p67, %p68
      %p70 = scmp.ne.s32.totalorder %s59, %s62
      %p71 = scmp.eq.s32.totalorder %s40, 1
      %p72 = por %p70, %p71
      %p73 = scmp.ne.s32.totalorder %s62, %s63
      %p74 = scmp.eq.s32.totalorder %s40, 0
      %p75 = por %p73, %p74
      %p76 = scmp.ne.s32.totalorder %s62, %s63
      %p77 = scmp.eq.s32.totalorder %s41, 1
      %p78 = por %p76, %p77
      %p80 = scmp.ne.s32.totalorder %s63, %s79
      %p81 = scmp.eq.s32.totalorder %s41, 0
      %p82 = por %p80, %p81
      %s83 = ssub.s32 %s42, %s54
      %s84 = ssub.s32 %s43, %s50
      %s85 = sor.u32 %s83, %s84
      %p86 = scmp.eq.s32.totalorder %s85, 0
      %s88 = sadd.s32 %s87, 1
      %s89 = scalar_select %p86, %s87, %s88
      %p92 = pneg %p86
      %p93 = scmp.eq.s32.totalorder %s35, 1
      %p94 = por %p92, %p93
      %p95 = scmp.ne.s32.totalorder %s87, %s90
      %p96 = scmp.eq.s32.totalorder %s35, 0
      %p97 = por %p95, %p96
      %p98 = scmp.ne.s32.totalorder %s87, %s90
      %p99 = scmp.eq.s32.totalorder %s40, 1
      %p100 = por %p98, %p99
      %p101 = scmp.ne.s32.totalorder %s90, %s91
      %p102 = scmp.eq.s32.totalorder %s40, 0
      %p103 = por %p101, %p102
      %p104 = scmp.ne.s32.totalorder %s90, %s91
      %p105 = scmp.eq.s32.totalorder %s41, 1
      %p106 = por %p104, %p105
      %p108 = scmp.ne.s32.totalorder %s91, %s107
      %p109 = scmp.eq.s32.totalorder %s41, 0
      %p110 = por %p108, %p109
      %s112 = sadd.s32 %s111, 1
      %p115 = scmp.eq.s32.totalorder %s35, 1
      %p116 = scmp.ne.s32.totalorder %s111, %s113
      %p117 = scmp.eq.s32.totalorder %s35, 0
      %p118 = por %p116, %p117
      %p119 = scmp.ne.s32.totalorder %s111, %s113
      %p120 = scmp.eq.s32.totalorder %s40, 1
      %p121 = por %p119, %p120
      %p122 = scmp.ne.s32.totalorder %s113, %s114
      %p123 = scmp.eq.s32.totalorder %s40, 0
      %p124 = por %p122, %p123
      %p125 = scmp.ne.s32.totalorder %s113, %s114
      %p126 = scmp.eq.s32.totalorder %s41, 1
      %p127 = por %p125, %p126
      %p129 = scmp.ne.s32.totalorder %s114, %s128
      %p130 = scmp.eq.s32.totalorder %s41, 0
      %p131 = por %p129, %p130
      %s133 = sadd.s32 %s132, 1
      %p136 = scmp.eq.s32.totalorder %s35, 1
      %p137 = scmp.ne.s32.totalorder %s132, %s134
      %p138 = scmp.eq.s32.totalorder %s35, 0
      %p139 = por %p137, %p138
      %p140 = scmp.ne.s32.totalorder %s132, %s134
      %p141 = scmp.eq.s32.totalorder %s40, 1
      %p142 = por %p140, %p141
      %p143 = scmp.ne.s32.totalorder %s134, %s135
      %p144 = scmp.eq.s32.totalorder %s40, 0
      %p145 = por %p143, %p144
      %p146 = scmp.ne.s32.totalorder %s134, %s135
      %p147 = scmp.eq.s32.totalorder %s41, 1
      %p148 = por %p146, %p147
      %p150 = scmp.ne.s32.totalorder %s135, %s149
      %p151 = scmp.eq.s32.totalorder %s41, 0
      %p152 = por %p150, %p151
      %s153 = ssub.s32 %s42, %s54
      %s154 = ssub.s32 %s43, %s50
      %s155 = sor.u32 %s153, %s154
      %p156 = scmp.eq.s32.totalorder %s155, 0
      %s158 = sadd.s32 %s157, 1
      %s159 = scalar_select %p156, %s157, %s158
      %p162 = pneg %p156
      %p163 = scmp.eq.s32.totalorder %s35, 1
      %p164 = por %p162, %p163
      %p165 = scmp.ne.s32.totalorder %s157, %s160
      %p166 = scmp.eq.s32.totalorder %s35, 0
      %p167 = por %p165, %p166
      %p168 = scmp.ne.s32.totalorder %s157, %s160
      %p169 = scmp.eq.s32.totalorder %s40, 1
      %p170 = por %p168, %p169
      %p171 = scmp.ne.s32.totalorder %s160, %s161
      %p172 = scmp.eq.s32.totalorder %s40, 0
      %p173 = por %p171, %p172
      %p174 = scmp.ne.s32.totalorder %s160, %s161
      %p175 = scmp.eq.s32.totalorder %s41, 1
      %p176 = por %p174, %p175
      %p178 = scmp.ne.s32.totalorder %s161, %s177
      %p179 = scmp.eq.s32.totalorder %s41, 0
      %p180 = por %p178, %p179
      %s181 = ssub.s32 %s42, %s54
      %s182 = ssub.s32 %s43, %s50
      %s183 = sor.u32 %s181, %s182
      %p184 = scmp.eq.s32.totalorder %s183, 0
      %s186 = sadd.s32 %s185, 1
      %s187 = scalar_select %p184, %s185, %s186
      %p190 = pneg %p184
      %p191 = scmp.eq.s32.totalorder %s35, 1
      %p192 = por %p190, %p191
      %p193 = scmp.ne.s32.totalorder %s185, %s188
      %p194 = scmp.eq.s32.totalorder %s35, 0
      %p195 = por %p193, %p194
      %p196 = scmp.ne.s32.totalorder %s185, %s188
      %p197 = scmp.eq.s32.totalorder %s40, 1
      %p198 = por %p196, %p197
      %p199 = scmp.ne.s32.totalorder %s188, %s189
      %p200 = scmp.eq.s32.totalorder %s40, 0
      %p201 = por %p199, %p200
      %p202 = scmp.ne.s32.totalorder %s188, %s189
      %p203 = scmp.eq.s32.totalorder %s41, 1
      %p204 = por %p202, %p203
      %p206 = scmp.ne.s32.totalorder %s189, %s205
      %p207 = scmp.eq.s32.totalorder %s41, 0
      %p208 = por %p206, %p207
      %s209 = ssub.s32 %s42, %s54
      %s210 = ssub.s32 %s43, %s50
      %s211 = sor.u32 %s209, %s210
      %p212 = scmp.eq.s32.totalorder %s211, 0
      %s214 = sadd.s32 %s213, 1
      %s215 = scalar_select %p212, %s213, %s214
      %p218 = pneg %p212
      %p219 = scmp.eq.s32.totalorder %s35, 1
      %p220 = por %p218, %p219
      %p221 = scmp.ne.s32.totalorder %s213, %s216
      %p222 = scmp.eq.s32.totalorder %s35, 0
      %p223 = por %p221, %p222
      %p224 = scmp.ne.s32.totalorder %s213, %s216
      %p225 = scmp.eq.s32.totalorder %s40, 1
      %p226 = por %p224, %p225
      %p227 = scmp.ne.s32.totalorder %s216, %s217
      %p228 = scmp.eq.s32.totalorder %s40, 0
      %p229 = por %p227, %p228
      %p230 = scmp.ne.s32.totalorder %s216, %s217
      %p231 = scmp.eq.s32.totalorder %s41, 1
      %p232 = por %p230, %p231
      %p234 = scmp.ne.s32.totalorder %s217, %s233
      %p235 = scmp.eq.s32.totalorder %s41, 0
      %p236 = por %p234, %p235
      %s237 = ssub.s32 %s42, %s54
      %s238 = ssub.s32 %s43, %s50
      %s239 = sor.u32 %s237, %s238
      %p240 = scmp.eq.s32.totalorder %s239, 0
      %s242 = sadd.s32 %s241, 1
      %s243 = scalar_select %p240, %s241, %s242
      %p246 = pneg %p240
      %p247 = scmp.eq.s32.totalorder %s35, 1
      %p248 = por %p246, %p247
      %p249 = scmp.ne.s32.totalorder %s241, %s244
      %p250 = scmp.eq.s32.totalorder %s35, 0
      %p251 = por %p249, %p250
      %p252 = scmp.ne.s32.totalorder %s241, %s244
      %p253 = scmp.eq.s32.totalorder %s40, 1
      %p254 = por %p252, %p253
      %p255 = scmp.ne.s32.totalorder %s244, %s245
      %p256 = scmp.eq.s32.totalorder %s40, 0
      %p257 = por %p255, %p256
      %p258 = scmp.ne.s32.totalorder %s244, %s245
      %p259 = scmp.eq.s32.totalorder %s41, 1
      %p260 = por %p258, %p259
      %p262 = scmp.ne.s32.totalorder %s245, %s261
      %p263 = scmp.eq.s32.totalorder %s41, 0
      %p264 = por %p262, %p263
      %s265 = ssub.s32 %s42, %s54
      %s266 = ssub.s32 %s43, %s50
      %s267 = sor.u32 %s265, %s266
      %p268 = scmp.eq.s32.totalorder %s267, 0
      %s270 = sadd.s32 %s269, 1
      %s271 = scalar_select %p268, %s269, %s270
      %p274 = pneg %p268
      %p275 = scmp.eq.s32.totalorder %s35, 1
      %p276 = por %p274, %p275
      %p277 = scmp.ne.s32.totalorder %s269, %s272
      %p278 = scmp.eq.s32.totalorder %s35, 0
      %p279 = por %p277, %p278
      %p280 = scmp.ne.s32.totalorder %s269, %s272
      %p281 = scmp.eq.s32.totalorder %s40, 1
      %p282 = por %p280, %p281
      %p283 = scmp.ne.s32.totalorder %s272, %s273
      %p284 = scmp.eq.s32.totalorder %s40, 0
      %p285 = por %p283, %p284
      %p286 = scmp.ne.s32.totalorder %s272, %s273
      %p287 = scmp.eq.s32.totalorder %s41, 1
      %p288 = por %p286, %p287
      %p290 = scmp.ne.s32.totalorder %s273, %s289
      %p291 = scmp.eq.s32.totalorder %s41, 0
      %p292 = por %p290, %p291
      %s293 = ssub.s32 %s42, %s54
      %s294 = ssub.s32 %s43, %s50
      %s295 = sor.u32 %s293, %s294
      %p296 = scmp.eq.s32.totalorder %s295, 0
      %s298 = sadd.s32 %s297, 1
      %s299 = scalar_select %p296, %s297, %s298
      %p302 = pneg %p296
      %p303 = scmp.eq.s32.totalorder %s35, 1
      %p304 = por %p302, %p303
      %p305 = scmp.ne.s32.totalorder %s297, %s300
      %p306 = scmp.eq.s32.totalorder %s35, 0
      %p307 = por %p305, %p306
      %p308 = scmp.ne.s32.totalorder %s297, %s300
      %p309 = scmp.eq.s32.totalorder %s40, 1
      %p310 = por %p308, %p309
      %p311 = scmp.ne.s32.totalorder %s300, %s301
      %p312 = scmp.eq.s32.totalorder %s40, 0
      %p313 = por %p311, %p312
      %p314 = scmp.ne.s32.totalorder %s300, %s301
      %p315 = scmp.eq.s32.totalorder %s41, 1
      %p316 = por %p314, %p315
      %p318 = scmp.ne.s32.totalorder %s301, %s317
      %p319 = scmp.eq.s32.totalorder %s41, 0
      %p320 = por %p318, %p319
      %s321 = ssub.s32 %s42, %s54
      %s322 = ssub.s32 %s43, %s50
      %s323 = sor.u32 %s321, %s322
      %p324 = scmp.eq.s32.totalorder %s323, 0
      %s326 = sadd.s32 %s325, 1
      %s327 = scalar_select %p324, %s325, %s326
      %p330 = pneg %p324
      %p331 = scmp.eq.s32.totalorder %s35, 1
      %p332 = por %p330, %p331
      %p333 = scmp.ne.s32.totalorder %s325, %s328
      %p334 = scmp.eq.s32.totalorder %s35, 0
      %p335 = por %p333, %p334
      %p336 = scmp.ne.s32.totalorder %s325, %s328
      %p337 = scmp.eq.s32.totalorder %s40, 1
      %p338 = por %p336, %p337
      %p339 = scmp.ne.s32.totalorder %s328, %s329
      %p340 = scmp.eq.s32.totalorder %s40, 0
      %p341 = por %p339, %p340
      %p342 = scmp.ne.s32.totalorder %s328, %s329
      %p343 = scmp.eq.s32.totalorder %s41, 1
      %p344 = por %p342, %p343
      %p346 = scmp.ne.s32.totalorder %s329, %s345
      %p347 = scmp.eq.s32.totalorder %s41, 0
      %p348 = por %p346, %p347
      %s349 = ssub.s32 %s42, %s54
      %s350 = ssub.s32 %s43, %s50
      %s351 = sor.u32 %s349, %s350
      %p352 = scmp.eq.s32.totalorder %s351, 0
      %s354 = sadd.s32 %s353, 1
      %s355 = scalar_select %p352, %s353, %s354
      %p358 = pneg %p352
      %p359 = scmp.eq.s32.totalorder %s35, 1
      %p360 = por %p358, %p359
      %p361 = scmp.ne.s32.totalorder %s353, %s356
      %p362 = scmp.eq.s32.totalorder %s35, 0
      %p363 = por %p361, %p362
      %p364 = scmp.ne.s32.totalorder %s353, %s356
      %p365 = scmp.eq.s32.totalorder %s40, 1
      %p366 = por %p364, %p365
      %p367 = scmp.ne.s32.totalorder %s356, %s357
      %p368 = scmp.eq.s32.totalorder %s40, 0
      %p369 = por %p367, %p368
      %p370 = scmp.ne.s32.totalorder %s356, %s357
      %p371 = scmp.eq.s32.totalorder %s41, 1
      %p372 = por %p370, %p371
      %p374 = scmp.ne.s32.totalorder %s357, %s373
      %p375 = scmp.eq.s32.totalorder %s41, 0
      %p376 = por %p374, %p375
      %p377 = scmp.le.s32.totalorder 1, %s35
      %p378 = scmp.lt.s32.totalorder %s35, 3
      %p379 = pnand %p377, %p378
      %p380 = pneg %p379
      // Predicated region
      $region9: #{tpu_custom_call.1} parent=5 // pred_check
        _
      $region10: #{tpu_custom_call.1} parent=5 // pred_check_branch
        %382 = sbr.rel (%p379) target = $region12
      $region11: #{tpu_custom_call.1} parent=5 // pred_region
        %s383 = ssub.s32 %s35, 1
        // Predicated region
        $region13: #{tpu_custom_call.1} parent=11 // pred_check
          %p384 = pneg %p124
        $region14: #{tpu_custom_call.1} parent=11 // pred_check_branch
          %386 = sbr.rel (%p384) target = $region16
        $region15: #{tpu_custom_call.1} parent=11 // pred_region
          %s388 = ssub.s32 64, 64
          %389 = vsyncadd [#allocation4], %s388
          %s391 = sshll.u32 %s2, 4
          %s392 = int_to_ptr.vmem [resolvable:$true] %s391
          %394 = dma.vmem_to_smem %s392, 64, [#allocation2], [#allocation4]
        $region16: #{tpu_custom_call.1} parent=11 // pred_fallthru
          _
        // Predicated region
        $region17: #{tpu_custom_call.1} parent=11 // pred_check
          %p395 = pneg %p145
        $region18: #{tpu_custom_call.1} parent=11 // pred_check_branch
          %397 = sbr.rel (%p395) target = $region20
        $region19: #{tpu_custom_call.1} parent=11 // pred_region
          %s399 = ssub.s32 16, 16
          %400 = vsyncadd [#allocation6], %s399
          %s402 = sshll.u32 %s3, 4
          %s403 = int_to_ptr.vmem [resolvable:$true] %s402
          %405 = dma.vmem_to_smem %s403, 16, [#allocation5], [#allocation6]
        $region20: #{tpu_custom_call.1} parent=11 // pred_fallthru
          _
      $region12: #{tpu_custom_call.1} parent=5 // pred_fallthru
        _
      %p406 = scmp.lt.s32.totalorder %s35, 2
      // Predicated region
      $region21: #{tpu_custom_call.1} parent=5 // pred_check
        %p407 = pneg %p406
      $region22: #{tpu_custom_call.1} parent=5 // pred_check_branch
        %409 = sbr.rel (%p407) target = $region24
      $region23: #{tpu_custom_call.1} parent=5 // pred_region
        // Predicated region
        $region25: #{tpu_custom_call.1} parent=23 // pred_check
          %p410 = pneg %p69
        $region26: #{tpu_custom_call.1} parent=23 // pred_check_branch
          %412 = sbr.rel (%p410) target = $region28
        $region27: #{tpu_custom_call.1} parent=23 // pred_region
          %s413 = smul.u32 2, %s43
          %p414 = scmp.lt.s32.totalorder %s42, 1
          %s415 = scalar_select %p414, %s42, 1
          %p416 = scmp.lt.s32.totalorder %s413, 1
          %s417 = scalar_select %p416, %s413, 1
          %s418 = smul.addr %s415, 2
          %s419 = sadd.s32 %s417, %s418
          %s420 = smul.addr %s419, 4
          %s421 = scalar_lea.vmem %s0, %s420
          %s422 = smul.u32 2, %s43
        $region28: #{tpu_custom_call.1} parent=23 // pred_fallthru
          _
        // Predicated region
        $region29: #{tpu_custom_call.1} parent=23 // pred_check
          %p423 = pneg %p97
        $region30: #{tpu_custom_call.1} parent=23 // pred_check_branch
          %425 = sbr.rel (%p423) target = $region32
        $region31: #{tpu_custom_call.1} parent=23 // pred_region
          %s426 = smul.u32 2, %s43
          %p427 = scmp.lt.s32.totalorder %s42, 1
          %s428 = scalar_select %p427, %s42, 1
          %p429 = scmp.lt.s32.totalorder %s426, 1
          %s430 = scalar_select %p429, %s426, 1
          %s431 = smul.addr %s428, 2
          %s432 = sadd.s32 %s430, %s431
          %s433 = smul.addr %s432, 4
          %s434 = scalar_lea.vmem %s1, %s433
          %s435 = smul.u32 2, %s43
        $region32: #{tpu_custom_call.1} parent=23 // pred_fallthru
          _
      $region24: #{tpu_custom_call.1} parent=5 // pred_fallthru
        _
      %p436 = scmp.le.s32.totalorder 1, %s35
      %p437 = scmp.lt.s32.totalorder %s35, 3
      %p438 = pnand %p436, %p437
      %p439 = pneg %p438
      // Predicated region
      $region33: #{tpu_custom_call.1} parent=5 // pred_check
        _
      $region34: #{tpu_custom_call.1} parent=5 // pred_check_branch
        %441 = sbr.rel (%p438) target = $region36
      $region35: #{tpu_custom_call.1} parent=5 // pred_region
        %s442 = ssub.s32 %s35, 1
        // Predicated region
        $region37: #{tpu_custom_call.1} parent=35 // pred_check
          %p443 = pneg %p124
        $region38: #{tpu_custom_call.1} parent=35 // pred_check_branch
          %445 = sbr.rel (%p443) target = $region40
        $region39: #{tpu_custom_call.1} parent=35 // pred_region
          %446 = dma.done [#allocation4], 64
        $region40: #{tpu_custom_call.1} parent=35 // pred_fallthru
          _
        // Predicated region
        $region41: #{tpu_custom_call.1} parent=35 // pred_check
          %p447 = pneg %p145
        $region42: #{tpu_custom_call.1} parent=35 // pred_check_branch
          %449 = sbr.rel (%p447) target = $region44
        $region43: #{tpu_custom_call.1} parent=35 // pred_region
          %450 = dma.done [#allocation6], 16
        $region44: #{tpu_custom_call.1} parent=35 // pred_fallthru
          _
        %451 = sfence
        %s452 = smul.u32 2, %s45
        %p453 = scmp.lt.s32.totalorder %s44, 1
        %s454 = scalar_select %p453, %s44, 1
        %p455 = scmp.lt.s32.totalorder %s452, 1
        %s456 = scalar_select %p455, %s452, 1
        %s457 = smul.addr %s454, 2
        %s458 = sadd.s32 %s456, %s457
        %s459 = smul.addr %s458, 4
        %s460 = scalar_lea.vmem %s0, %s459
        %p461 = pneg %p75
        %p462 = pneg %p72
        %s463 = smul.u32 2, %s45
        %p464 = scmp.lt.s32.totalorder %s44, 1
        %s465 = scalar_select %p464, %s44, 1
        %p466 = scmp.lt.s32.totalorder %s463, 1
        %s467 = scalar_select %p466, %s463, 1
        %s468 = smul.addr %s465, 2
        %s469 = sadd.s32 %s467, %s468
        %s470 = smul.addr %s469, 4
        %s471 = scalar_lea.vmem %s1, %s470
        %p472 = pneg %p103
        %p473 = pneg %p100
        %p474 = pneg %p124
        %p475 = pneg %p121
        %p476 = pneg %p145
        %p477 = pneg %p142
        %p478 = pneg %p173
        %p479 = pneg %p170
        %s480 = sand.u32 %s160, 1
        %s481 = scalar_lea.sflag [#allocation3], %s480
        %s482 = sand.u32 %s160, 1
        %s483 = smul.addr %s482, 2
        %s484 = scalar_lea.vmem [#allocation7], %s483
        %p485 = pneg %p201
        %p486 = pneg %p198
        %s487 = sand.u32 %s40, 1
        %s488 = scalar_lea.sflag [#allocation9], %s487
        %s489 = sand.u32 %s188, 1
        %s490 = smul.addr %s489, 2
        %s491 = scalar_lea.vmem [#allocation8], %s490
        %p492 = pneg %p229
        %p493 = pneg %p226
        %s494 = sand.u32 %s40, 1
        %s495 = scalar_lea.sflag [#allocation9], %s494
        %s496 = sand.u32 %s216, 1
        %s497 = smul.addr %s496, 2
        %s498 = scalar_lea.vmem [#allocation10], %s497
        %p499 = pneg %p257
        %p500 = pneg %p254
        %s501 = sand.u32 %s40, 1
        %s502 = scalar_lea.sflag [#allocation12], %s501
        %s503 = sand.u32 %s244, 1
        %s504 = smul.addr %s503, 2
        %s505 = scalar_lea.vmem [#allocation11], %s504
        %p506 = pneg %p285
        %p507 = pneg %p282
        %s508 = sand.u32 %s40, 1
        %s509 = scalar_lea.sflag [#allocation12], %s508
        %s510 = sand.u32 %s272, 1
        %s511 = smul.addr %s510, 2
        %s512 = scalar_lea.vmem [#allocation13], %s511
        %p513 = pneg %p313
        %p514 = pneg %p310
        %s515 = sand.u32 %s40, 1
        %s516 = scalar_lea.sflag [#allocation15], %s515
        %s517 = sand.u32 %s300, 1
        %s518 = smul.addr %s517, 2
        %s519 = scalar_lea.vmem [#allocation14], %s518
        %p520 = pneg %p341
        %p521 = pneg %p338
        %s522 = sand.u32 %s40, 1
        %s523 = scalar_lea.sflag [#allocation15], %s522
        %s524 = sand.u32 %s328, 1
        %s525 = smul.addr %s524, 2
        %s526 = scalar_lea.vmem [#allocation16], %s525
        %p527 = pneg %p369
        %p528 = pneg %p366
        %s529 = sand.u32 %s356, 1
        %s530 = scalar_lea.sflag [#allocation18], %s529
        %s531 = sand.u32 %s356, 1
        %s532 = smul.addr %s531, 2
        %s533 = scalar_lea.vmem [#allocation17], %s532
        %s534 = smul.u32 2, %s45
        %p535 = scmp.lt.s32.totalorder %s44, 1
        %s536 = scalar_select %p535, %s44, 1
        %p537 = scmp.lt.s32.totalorder %s534, 1
        %s538 = scalar_select %p537, %s534, 1
        %s539 = smul.addr %s536, 2
        %s540 = sadd.s32 %s538, %s539
        %s541 = smul.addr %s540, 4
        %s542 = scalar_lea.vmem %s0, %s541
        %s543 = smul.u32 2, %s45
        %s544 = smul.u32 2, %s45
        %p545 = scmp.lt.s32.totalorder %s44, 1
        %s546 = scalar_select %p545, %s44, 1
        %p547 = scmp.lt.s32.totalorder %s544, 1
        %s548 = scalar_select %p547, %s544, 1
        %s549 = smul.addr %s546, 2
        %s550 = sadd.s32 %s548, %s549
        %s551 = smul.addr %s550, 4
        %s552 = scalar_lea.vmem %s1, %s551
        %s553 = smul.u32 2, %s45
        %s554 = smul.u32 2, %s45
        %s555 = smul.u32 2, %s45
        %s556 = smul.u32 2, %s45
        %s557 = smul.u32 2, %s45
        %s558 = smul.u32 2, %s45
        %s559 = smul.u32 2, %s45
        %s560 = smul.u32 2, %s45
        %s561 = smul.u32 2, %s45
        %v562 = vld [vmem:[%s542] ss:$4 sm:$0x3]
        %s563 = scalar_lea.vmem %s542, 1
        %v564 = vld [vmem:[%s563] ss:$4 sm:$0x3]
        %s565 = scalar_lea.vmem %s542, 2
        %v566 = vld [vmem:[%s565] ss:$4 sm:$0x3]
        %v567 = vld [vmem:[%s552] ss:$4 sm:$0x3]
        %s568 = scalar_lea.vmem %s552, 1
        %v569 = vld [vmem:[%s568] ss:$4 sm:$0x3]
        %s570 = scalar_lea.vmem %s552, 2
        %v571 = vld [vmem:[%s570] ss:$4 sm:$0x3]
        %s572 = sld [smem:[#allocation2]]
        %s573 = sld [smem:[#allocation2 + $0x1]]
        %s574 = sld [smem:[#allocation2 + $0x2]]
        %s575 = sld [smem:[#allocation2 + $0x80]]
        %s576 = sld [smem:[#allocation2 + $0x81]]
        %s577 = sld [smem:[#allocation2 + $0x82]]
        %s578 = sld [smem:[#allocation2 + $0x100]]
        %s579 = sld [smem:[#allocation2 + $0x101]]
        %s580 = sld [smem:[#allocation2 + $0x102]]
        %s581 = sld [smem:[#allocation5]]
        %s582 = sld [smem:[#allocation5 + $0x1]]
        %s583 = sld [smem:[#allocation5 + $0x2]]
        %v584 = vstv %s572
        %v585 = vmul.f32 %v584, %v562
        %v586 = vstv %s573
        %v587 = vmul.f32 %v586, %v564
        %v588 = vadd.f32 %v585, %v587
        %v589 = vstv %s574
        %v590 = vmul.f32 %v589, %v566
        %v591 = vadd.f32 %v588, %v590
        %v592 = vstv %s581
        %v593 = vadd.f32 %v591, %v592
        %v594 = vstv %s575
        %v595 = vmul.f32 %v594, %v562
        %v596 = vstv %s576
        %v597 = vmul.f32 %v596, %v564
        %v598 = vadd.f32 %v595, %v597
        %v599 = vstv %s577
        %v600 = vmul.f32 %v599, %v566
        %v601 = vadd.f32 %v598, %v600
        %v602 = vstv %s582
        %v603 = vadd.f32 %v601, %v602
        %v604 = vstv %s578
        %v605 = vmul.f32 %v604, %v562
        %v606 = vstv %s579
        %v607 = vmul.f32 %v606, %v564
        %v608 = vadd.f32 %v605, %v607
        %v609 = vstv %s580
        %v610 = vmul.f32 %v609, %v566
        %v611 = vadd.f32 %v608, %v610
        %v612 = vstv %s583
        %v613 = vadd.f32 %v611, %v612
        %v614 = vmul.f32 %v584, %v567
        %v615 = vmul.f32 %v586, %v569
        %v616 = vadd.f32 %v614, %v615
        %v617 = vmul.f32 %v589, %v571
        %v618 = vadd.f32 %v616, %v617
        %v619 = vadd.f32 %v618, %v592
        %v620 = vmul.f32 %v594, %v567
        %v621 = vmul.f32 %v596, %v569
        %v622 = vadd.f32 %v620, %v621
        %v623 = vmul.f32 %v599, %v571
        %v624 = vadd.f32 %v622, %v623
        %v625 = vadd.f32 %v624, %v602
        %v626 = vmul.f32 %v604, %v567
        %v627 = vmul.f32 %v606, %v569
        %v628 = vadd.f32 %v626, %v627
        %v629 = vmul.f32 %v609, %v571
        %v630 = vadd.f32 %v628, %v629
        %v631 = vadd.f32 %v630, %v612
        %v632 = vlaneseq
        %vm633 = vcmp.ge.s32.totalorder %v632, 0
        %vm634 = vcmp.lt.s32.totalorder %v632, 256
        %vm635 = vmand %vm633, %vm634
        %636 = vst.msk [vmem:[%s484] sm:$0x3] %vm635, %v593
        %637 = vst.msk [vmem:[%s491] sm:$0x3] %vm635, %v603
        %638 = vst.msk [vmem:[%s498] sm:$0x3] %vm635, %v613
        %639 = vst.msk [vmem:[%s505] sm:$0x3] %vm635, %v619
        %640 = vst.msk [vmem:[%s512] sm:$0x3] %vm635, %v625
        %641 = vst.msk [vmem:[%s519] sm:$0x3] %vm635, %v631
        %v642 = vsub.f32 %v593, %v631
        %643 = vst.msk [vmem:[%s526] sm:$0x3] %vm635, %v642
        %v644 = vsub.f32 %v625, %v613
        %645 = vst.msk [vmem:[%s533] sm:$0x3] %vm635, %v644
        %s646 = sand.u32 %s160, 1
        %s647 = scalar_lea.sflag [#allocation3], %s646
        %s648 = sand.u32 %s160, 1
        %s649 = smul.addr %s648, 2
        %s650 = scalar_lea.vmem [#allocation7], %s649
        %s651 = sand.u32 %s40, 1
        %s652 = scalar_lea.sflag [#allocation9], %s651
        %s653 = sand.u32 %s188, 1
        %s654 = smul.addr %s653, 2
        %s655 = scalar_lea.vmem [#allocation8], %s654
        %s656 = sand.u32 %s40, 1
        %s657 = scalar_lea.sflag [#allocation9], %s656
        %s658 = sand.u32 %s216, 1
        %s659 = smul.addr %s658, 2
        %s660 = scalar_lea.vmem [#allocation10], %s659
        %s661 = sand.u32 %s40, 1
        %s662 = scalar_lea.sflag [#allocation12], %s661
        %s663 = sand.u32 %s244, 1
        %s664 = smul.addr %s663, 2
        %s665 = scalar_lea.vmem [#allocation11], %s664
        %s666 = sand.u32 %s40, 1
        %s667 = scalar_lea.sflag [#allocation12], %s666
        %s668 = sand.u32 %s272, 1
        %s669 = smul.addr %s668, 2
        %s670 = scalar_lea.vmem [#allocation13], %s669
        %s671 = sand.u32 %s40, 1
        %s672 = scalar_lea.sflag [#allocation15], %s671
        %s673 = sand.u32 %s300, 1
        %s674 = smul.addr %s673, 2
        %s675 = scalar_lea.vmem [#allocation14], %s674
        %s676 = sand.u32 %s40, 1
        %s677 = scalar_lea.sflag [#allocation15], %s676
        %s678 = sand.u32 %s328, 1
        %s679 = smul.addr %s678, 2
        %s680 = scalar_lea.vmem [#allocation16], %s679
        %s681 = sand.u32 %s356, 1
        %s682 = scalar_lea.sflag [#allocation18], %s681
        %s683 = sand.u32 %s356, 1
        %s684 = smul.addr %s683, 2
        %s685 = scalar_lea.vmem [#allocation17], %s684
        // Predicated region
        $region45: #{tpu_custom_call.1} parent=35 // pred_check
          %p686 = pneg %p170
        $region46: #{tpu_custom_call.1} parent=35 // pred_check_branch
          %688 = sbr.rel (%p686) target = $region48
        $region47: #{tpu_custom_call.1} parent=35 // pred_region
          %s689 = smul.u32 2, %s45
          %s691 = ssub.s32 32, 32
          %692 = vsyncadd %s647, %s691
          %s693 = smul.addr %s44, 2
          %s694 = sadd.s32 %s689, %s693
          %s695 = smul.addr %s694, 16
          %s696 = scalar_lea.hbm %s4, %s695
          %s698 = sshll.u32 %s650, 4
          %s699 = int_to_ptr.vmem [resolvable:$true] %s698
          %701 = dma.vmem_to_hbm [thread:$0]  %s699, 32, %s696, %s647
        $region48: #{tpu_custom_call.1} parent=35 // pred_fallthru
          _
        // Predicated region
        $region49: #{tpu_custom_call.1} parent=35 // pred_check
          %p702 = pneg %p198
        $region50: #{tpu_custom_call.1} parent=35 // pred_check_branch
          %704 = sbr.rel (%p702) target = $region52
        $region51: #{tpu_custom_call.1} parent=35 // pred_region
          %s705 = smul.u32 2, %s45
          %s707 = ssub.s32 32, 32
          %708 = vsyncadd %s652, %s707
          %s709 = smul.addr %s44, 2
          %s710 = sadd.s32 %s705, %s709
          %s711 = smul.addr %s710, 16
          %s712 = scalar_lea.hbm %s5, %s711
          %s714 = sshll.u32 %s655, 4
          %s715 = int_to_ptr.vmem [resolvable:$true] %s714
          %717 = dma.vmem_to_hbm [thread:$0]  %s715, 32, %s712, %s652
        $region52: #{tpu_custom_call.1} parent=35 // pred_fallthru
          _
        // Predicated region
        $region53: #{tpu_custom_call.1} parent=35 // pred_check
          %p718 = pneg %p226
        $region54: #{tpu_custom_call.1} parent=35 // pred_check_branch
          %720 = sbr.rel (%p718) target = $region56
        $region55: #{tpu_custom_call.1} parent=35 // pred_region
          %s721 = smul.u32 2, %s45
          %s723 = ssub.s32 32, 32
          %724 = vsyncadd %s657, %s723
          %s725 = smul.addr %s44, 2
          %s726 = sadd.s32 %s721, %s725
          %s727 = smul.addr %s726, 16
          %s728 = scalar_lea.hbm %s6, %s727
          %s730 = sshll.u32 %s660, 4
          %s731 = int_to_ptr.vmem [resolvable:$true] %s730
          %733 = dma.vmem_to_hbm [thread:$0]  %s731, 32, %s728, %s657
        $region56: #{tpu_custom_call.1} parent=35 // pred_fallthru
          _
        // Predicated region
        $region57: #{tpu_custom_call.1} parent=35 // pred_check
          %p734 = pneg %p254
        $region58: #{tpu_custom_call.1} parent=35 // pred_check_branch
          %736 = sbr.rel (%p734) target = $region60
        $region59: #{tpu_custom_call.1} parent=35 // pred_region
          %s737 = smul.u32 2, %s45
          %s739 = ssub.s32 32, 32
          %740 = vsyncadd %s662, %s739
          %s741 = smul.addr %s44, 2
          %s742 = sadd.s32 %s737, %s741
          %s743 = smul.addr %s742, 16
          %s744 = scalar_lea.hbm %s7, %s743
          %s746 = sshll.u32 %s665, 4
          %s747 = int_to_ptr.vmem [resolvable:$true] %s746
          %749 = dma.vmem_to_hbm [thread:$0]  %s747, 32, %s744, %s662
        $region60: #{tpu_custom_call.1} parent=35 // pred_fallthru
          _
        // Predicated region
        $region61: #{tpu_custom_call.1} parent=35 // pred_check
          %p750 = pneg %p282
        $region62: #{tpu_custom_call.1} parent=35 // pred_check_branch
          %752 = sbr.rel (%p750) target = $region64
        $region63: #{tpu_custom_call.1} parent=35 // pred_region
          %s753 = smul.u32 2, %s45
          %s755 = ssub.s32 32, 32
          %756 = vsyncadd %s667, %s755
          %s757 = smul.addr %s44, 2
          %s758 = sadd.s32 %s753, %s757
          %s759 = smul.addr %s758, 16
          %s760 = scalar_lea.hbm %s8, %s759
          %s762 = sshll.u32 %s670, 4
          %s763 = int_to_ptr.vmem [resolvable:$true] %s762
          %765 = dma.vmem_to_hbm [thread:$0]  %s763, 32, %s760, %s667
        $region64: #{tpu_custom_call.1} parent=35 // pred_fallthru
          _
        // Predicated region
        $region65: #{tpu_custom_call.1} parent=35 // pred_check
          %p766 = pneg %p310
        $region66: #{tpu_custom_call.1} parent=35 // pred_check_branch
          %768 = sbr.rel (%p766) target = $region68
        $region67: #{tpu_custom_call.1} parent=35 // pred_region
          %s769 = smul.u32 2, %s45
          %s771 = ssub.s32 32, 32
          %772 = vsyncadd %s672, %s771
          %s773 = smul.addr %s44, 2
          %s774 = sadd.s32 %s769, %s773
          %s775 = smul.addr %s774, 16
          %s776 = scalar_lea.hbm %s9, %s775
          %s778 = sshll.u32 %s675, 4
          %s779 = int_to_ptr.vmem [resolvable:$true] %s778
          %781 = dma.vmem_to_hbm [thread:$0]  %s779, 32, %s776, %s672
        $region68: #{tpu_custom_call.1} parent=35 // pred_fallthru
          _
        // Predicated region
        $region69: #{tpu_custom_call.1} parent=35 // pred_check
          %p782 = pneg %p338
        $region70: #{tpu_custom_call.1} parent=35 // pred_check_branch
          %784 = sbr.rel (%p782) target = $region72
        $region71: #{tpu_custom_call.1} parent=35 // pred_region
          %s785 = smul.u32 2, %s45
          %s787 = ssub.s32 32, 32
          %788 = vsyncadd %s677, %s787
          %s789 = smul.addr %s44, 2
          %s790 = sadd.s32 %s785, %s789
          %s791 = smul.addr %s790, 16
          %s792 = scalar_lea.hbm %s10, %s791
          %s794 = sshll.u32 %s680, 4
          %s795 = int_to_ptr.vmem [resolvable:$true] %s794
          %797 = dma.vmem_to_hbm [thread:$0]  %s795, 32, %s792, %s677
        $region72: #{tpu_custom_call.1} parent=35 // pred_fallthru
          _
        // Predicated region
        $region73: #{tpu_custom_call.1} parent=35 // pred_check
          %p798 = pneg %p366
        $region74: #{tpu_custom_call.1} parent=35 // pred_check_branch
          %800 = sbr.rel (%p798) target = $region76
        $region75: #{tpu_custom_call.1} parent=35 // pred_region
          %s801 = smul.u32 2, %s45
          %s803 = ssub.s32 32, 32
          %804 = vsyncadd %s682, %s803
          %s805 = smul.addr %s44, 2
          %s806 = sadd.s32 %s801, %s805
          %s807 = smul.addr %s806, 16
          %s808 = scalar_lea.hbm %s11, %s807
          %s810 = sshll.u32 %s685, 4
          %s811 = int_to_ptr.vmem [resolvable:$true] %s810
          %813 = dma.vmem_to_hbm [thread:$0]  %s811, 32, %s808, %s682
        $region76: #{tpu_custom_call.1} parent=35 // pred_fallthru
          _
      $region36: #{tpu_custom_call.1} parent=5 // pred_fallthru
        _
      %p814 = scmp.le.s32.totalorder 2, %s35
      // Predicated region
      $region77: #{tpu_custom_call.1} parent=5 // pred_check
        %p815 = pneg %p814
      $region78: #{tpu_custom_call.1} parent=5 // pred_check_branch
        %817 = sbr.rel (%p815) target = $region80
      $region79: #{tpu_custom_call.1} parent=5 // pred_region
        %s818 = ssub.s32 %s35, 2
        // Predicated region
        $region81: #{tpu_custom_call.1} parent=79 // pred_check
          %p819 = pneg %p176
        $region82: #{tpu_custom_call.1} parent=79 // pred_check_branch
          %821 = sbr.rel (%p819) target = $region84
        $region83: #{tpu_custom_call.1} parent=79 // pred_region
          %s822 = sand.u32 %s161, 1
          %s823 = scalar_lea.sflag [#allocation3], %s822
          %s824 = sand.u32 %s161, 1
          %s825 = smul.addr %s824, 2
          %s826 = scalar_lea.vmem [#allocation7], %s825
          %827 = dma.done %s823, 32
        $region84: #{tpu_custom_call.1} parent=79 // pred_fallthru
          _
        // Predicated region
        $region85: #{tpu_custom_call.1} parent=79 // pred_check
          %p828 = pneg %p204
        $region86: #{tpu_custom_call.1} parent=79 // pred_check_branch
          %830 = sbr.rel (%p828) target = $region88
        $region87: #{tpu_custom_call.1} parent=79 // pred_region
          %s831 = sand.u32 %s41, 1
          %s832 = scalar_lea.sflag [#allocation9], %s831
          %s833 = sand.u32 %s189, 1
          %s834 = smul.addr %s833, 2
          %s835 = scalar_lea.vmem [#allocation8], %s834
          %836 = dma.done %s832, 32
        $region88: #{tpu_custom_call.1} parent=79 // pred_fallthru
          _
        // Predicated region
        $region89: #{tpu_custom_call.1} parent=79 // pred_check
          %p837 = pneg %p232
        $region90: #{tpu_custom_call.1} parent=79 // pred_check_branch
          %839 = sbr.rel (%p837) target = $region92
        $region91: #{tpu_custom_call.1} parent=79 // pred_region
          %s840 = sand.u32 %s41, 1
          %s841 = scalar_lea.sflag [#allocation9], %s840
          %s842 = sand.u32 %s217, 1
          %s843 = smul.addr %s842, 2
          %s844 = scalar_lea.vmem [#allocation10], %s843
          %845 = dma.done %s841, 32
        $region92: #{tpu_custom_call.1} parent=79 // pred_fallthru
          _
        // Predicated region
        $region93: #{tpu_custom_call.1} parent=79 // pred_check
          %p846 = pneg %p260
        $region94: #{tpu_custom_call.1} parent=79 // pred_check_branch
          %848 = sbr.rel (%p846) target = $region96
        $region95: #{tpu_custom_call.1} parent=79 // pred_region
          %s849 = sand.u32 %s41, 1
          %s850 = scalar_lea.sflag [#allocation12], %s849
          %s851 = sand.u32 %s245, 1
          %s852 = smul.addr %s851, 2
          %s853 = scalar_lea.vmem [#allocation11], %s852
          %854 = dma.done %s850, 32
        $region96: #{tpu_custom_call.1} parent=79 // pred_fallthru
          _
        // Predicated region
        $region97: #{tpu_custom_call.1} parent=79 // pred_check
          %p855 = pneg %p288
        $region98: #{tpu_custom_call.1} parent=79 // pred_check_branch
          %857 = sbr.rel (%p855) target = $region100
        $region99: #{tpu_custom_call.1} parent=79 // pred_region
          %s858 = sand.u32 %s41, 1
          %s859 = scalar_lea.sflag [#allocation12], %s858
          %s860 = sand.u32 %s273, 1
          %s861 = smul.addr %s860, 2
          %s862 = scalar_lea.vmem [#allocation13], %s861
          %863 = dma.done %s859, 32
        $region100: #{tpu_custom_call.1} parent=79 // pred_fallthru
          _
        // Predicated region
        $region101: #{tpu_custom_call.1} parent=79 // pred_check
          %p864 = pneg %p316
        $region102: #{tpu_custom_call.1} parent=79 // pred_check_branch
          %866 = sbr.rel (%p864) target = $region104
        $region103: #{tpu_custom_call.1} parent=79 // pred_region
          %s867 = sand.u32 %s41, 1
          %s868 = scalar_lea.sflag [#allocation15], %s867
          %s869 = sand.u32 %s301, 1
          %s870 = smul.addr %s869, 2
          %s871 = scalar_lea.vmem [#allocation14], %s870
          %872 = dma.done %s868, 32
        $region104: #{tpu_custom_call.1} parent=79 // pred_fallthru
          _
        // Predicated region
        $region105: #{tpu_custom_call.1} parent=79 // pred_check
          %p873 = pneg %p344
        $region106: #{tpu_custom_call.1} parent=79 // pred_check_branch
          %875 = sbr.rel (%p873) target = $region108
        $region107: #{tpu_custom_call.1} parent=79 // pred_region
          %s876 = sand.u32 %s41, 1
          %s877 = scalar_lea.sflag [#allocation15], %s876
          %s878 = sand.u32 %s329, 1
          %s879 = smul.addr %s878, 2
          %s880 = scalar_lea.vmem [#allocation16], %s879
          %881 = dma.done %s877, 32
        $region108: #{tpu_custom_call.1} parent=79 // pred_fallthru
          _
        // Predicated region
        $region109: #{tpu_custom_call.1} parent=79 // pred_check
          %p882 = pneg %p372
        $region110: #{tpu_custom_call.1} parent=79 // pred_check_branch
          %884 = sbr.rel (%p882) target = $region112
        $region111: #{tpu_custom_call.1} parent=79 // pred_region
          %s885 = sand.u32 %s357, 1
          %s886 = scalar_lea.sflag [#allocation18], %s885
          %s887 = sand.u32 %s357, 1
          %s888 = smul.addr %s887, 2
          %s889 = scalar_lea.vmem [#allocation17], %s888
          %890 = dma.done %s886, 32
        $region112: #{tpu_custom_call.1} parent=79 // pred_fallthru
          _
      $region80: #{tpu_custom_call.1} parent=5 // pred_fallthru
        _
    $region6: #{tpu_custom_call.1} parent=1 // loop_footer
      %s39 = sadd.s32 1, %s35
    $region7: #{tpu_custom_call.1} parent=1 // loop_footer_branch
      %34 = sbr.rel target = $region3
    $region8: #{tpu_custom_call.1} parent=1 // loop_exit
      _
    %891 = vsyncpa [#allocation3], 1
    %s892 = scalar_lea.sflag [#allocation3], 1
    %893 = vsyncpa %s892, 1
    %894 = vsyncpa [#allocation9], 1
    %s895 = scalar_lea.sflag [#allocation9], 1
    %896 = vsyncpa %s895, 1
    %897 = vsyncpa [#allocation12], 1
    %s898 = scalar_lea.sflag [#allocation12], 1
    %899 = vsyncpa %s898, 1
    %900 = vsyncpa [#allocation15], 1
    %s901 = scalar_lea.sflag [#allocation15], 1
    %902 = vsyncpa %s901, 1
    %903 = vsyncpa [#allocation18], 1
    %s904 = scalar_lea.sflag [#allocation18], 1
    %905 = vsyncpa %s904, 1
    %906 = vsyncpa [#allocation4], 1
    %s907 = scalar_lea.sflag [#allocation4], 1
    %908 = vsyncpa %s907, 1
    %909 = vsyncpa [#allocation6], 1

</llo_original>
